<compile_context>
chip_gen: v7x
topology: tpu7x:2x2x1
jax: 0.10.0
libtpu: 0.0.40
codegen_flags: <defaults>
</compile_context>

<pallas_src>
import jax
import jax.numpy as jnp
from jax.experimental import pallas as pl
from jax.experimental.pallas import tpu as pltpu


# ----------------------------------------------------------------------------- helpers

def _round_up(a: int, b: int) -> int:
    return (a + b - 1) // b * b


def _largest_aligned_divisor(n: int, align: int, cap: int) -> int:
    """Largest d such that d % align == 0, d divides n, d <= max(cap, align).

    Assumes n is a positive multiple of `align` (so d = align always works).
    Picking a divisor means the padded dimension needs no extra padding to be a
    multiple of the tile."""
    cap = max(cap, align)
    best = align
    d = align
    limit = min(n, cap)
    while d <= limit:
        if n % d == 0:
            best = d
        d += align
    return best


def _vmem_limit_bytes() -> int:
    # Derive the scoped-VMEM budget from the actual chip: ~48 MiB on v7x
    # (64 MiB per TensorCore), ~96 MiB on v5e/v6e (128 MiB).
    try:
        cap = pltpu.get_tpu_info().vmem_capacity_bytes
    except Exception:  # pragma: no cover - conservative fallback (v7x per-TC size)
        cap = 64 * 1024 * 1024
    return int(min(96 * 1024 * 1024, cap * 3 // 4))


_TM_CAP = 512
_TN_CAP = 512
_TK_CAP = 1024


def _select_tiles(B: int, din: int, hidden: int):
    """Pick (tm, tn, tk) minimizing padding, plus the padded problem dims."""
    Mp = _round_up(max(B, 1), 8)
    Hp = _round_up(hidden, 128)
    Kp = _round_up(din, 128)
    tm = _largest_aligned_divisor(Mp, 8, _TM_CAP)
    tn = _largest_aligned_divisor(Hp, 128, _TN_CAP)
    tk = _largest_aligned_divisor(Kp, 128, _TK_CAP)
    # v7x megacore: if batch only yields a single M block, make sure the N axis
    # has >= 2 blocks so the second TensorCore is not idle (possible iff Hp>=256).
    if Mp // tm == 1 and Hp // tn == 1 and Hp >= 256:
        tn = _largest_aligned_divisor(Hp, 128, Hp // 2)
    return tm, tn, tk, Mp, Hp, Kp


# ----------------------------------------------------------------------------- kernel

def encoder_kernel(x_ref, w_ref, b_ref, o_ref):
    k = pl.program_id(2)

    # (tm, tk) . (tn, tk) contracted over K (din) -> (tm, tn) on the MXU.
    # The weight keeps its PyTorch (hidden, din) layout: its contracting dim is
    # the LAST axis, so no transpose (wrapper- or XLU-side) is needed.
    partial = jax.lax.dot_general(
        x_ref[...], w_ref[...],
        dimension_numbers=(((1,), (1,)), ((), ())),
        preferred_element_type=jnp.float32,
    )

    # Accumulate directly into the f32 output ref (resident in VMEM across the
    # K axis); first K step stores (no zero-init pass), later steps accumulate.
    @pl.when(k == 0)
    def _():
        o_ref[...] = partial

    @pl.when(k > 0)
    def _():
        o_ref[...] += partial

    # Epilogue on the last K step: bias add ((1, tn) broadcast) + ReLU in place.
    @pl.when(k == pl.num_programs(2) - 1)
    def _():
        o_ref[...] = jnp.maximum(o_ref[...] + b_ref[...], 0.0)


def _encoder_call(xp, wp, bp, tm, tn, tk):
    """Run the pallas_call on already padded/laid-out operands."""
    Mp, Kp = xp.shape
    Hp = wp.shape[0]
    grid = (Mp // tm, Hp // tn, Kp // tk)

    in_itemsize = jnp.dtype(xp.dtype).itemsize
    cost = pl.CostEstimate(
        flops=2 * Mp * Hp * Kp,
        transcendentals=0,
        bytes_accessed=(
            Mp * Kp * in_itemsize * grid[1]   # x is re-read once per N block
            + Hp * Kp * in_itemsize * grid[0]  # W is re-read once per M block
            + Hp * 4 * grid[0]                 # bias per M block
            + Mp * Hp * 4                      # output written once
        ),
    )

    return pl.pallas_call(
        encoder_kernel,
        out_shape=jax.ShapeDtypeStruct((Mp, Hp), jnp.float32),
        grid_spec=pltpu.PrefetchScalarGridSpec(
            num_scalar_prefetch=0,
            grid=grid,
            in_specs=[
                pl.BlockSpec((tm, tk), lambda i, j, k: (i, k)),   # x tile
                pl.BlockSpec((tn, tk), lambda i, j, k: (j, k)),   # W tile (native layout)
                pl.BlockSpec((1, tn), lambda i, j, k: (0, j)),    # bias tile
            ],
            out_specs=pl.BlockSpec((tm, tn), lambda i, j, k: (i, j)),
        ),
        compiler_params=pltpu.CompilerParams(
            dimension_semantics=("parallel", "parallel", "arbitrary"),
            vmem_limit_bytes=_vmem_limit_bytes(),
        ),
        cost_estimate=cost,
    )(xp, wp, bp)


# ----------------------------------------------------------------------------- wrappers

def encoder_forward(x, weight, bias, *, compute_dtype=None):
    """One-shot forward.  x: (B, din); weight: (hidden, din); bias: (hidden,).

    compute_dtype=jnp.bfloat16 streams x/W as bf16 (f32 accumulation) for ~3x
    MXU throughput and half the HBM traffic on v6e/v7x."""
    B, din = x.shape
    hidden, din_w = weight.shape
    assert din_w == din and bias.shape == (hidden,)

    tm, tn, tk, Mp, Hp, Kp = _select_tiles(B, din, hidden)

    # These pads are no-ops for lane-aligned shapes thanks to the divisor-based
    # tile selection (padded K contributes 0; padded rows/cols are sliced off).
    xp = x if (Mp == B and Kp == din) else jnp.pad(x, ((0, Mp - B), (0, Kp - din)))
    wp = weight if (Hp == hidden and Kp == din) else jnp.pad(
        weight, ((0, Hp - hidden), (0, Kp - din)))
    bp = (bias if Hp == hidden else jnp.pad(bias, (0, Hp - hidden)))
    bp = bp.reshape(1, Hp).astype(jnp.float32)

    if compute_dtype is not None:
        xp = xp.astype(compute_dtype)
        wp = wp.astype(compute_dtype)

    out = _encoder_call(xp, wp, bp, tm, tn, tk)
    if Mp != B or Hp != hidden:
        out = out[:B, :hidden]
    return out


def make_encoder(weight, bias, *, compute_dtype=None):
    """Pre-pad / pre-cast the static weight & bias ONCE so the per-call hot path
    never does a wrapper-side HBM pass over W (weights are static across calls)."""
    hidden, din = weight.shape
    Hp = _round_up(hidden, 128)
    Kp = _round_up(din, 128)
    wp = weight if (Hp == hidden and Kp == din) else jnp.pad(
        weight, ((0, Hp - hidden), (0, Kp - din)))
    bp = (bias if Hp == hidden else jnp.pad(bias, (0, Hp - hidden)))
    bp = bp.reshape(1, Hp).astype(jnp.float32)
    if compute_dtype is not None:
        wp = wp.astype(compute_dtype)

    @jax.jit
    def forward(x):
        B, din_x = x.shape
        assert din_x == din
        tm, tn, tk, Mp, _, _ = _select_tiles(B, din, hidden)
        xp = x if (Mp == B and Kp == din) else jnp.pad(x, ((0, Mp - B), (0, Kp - din)))
        if compute_dtype is not None:
            xp = xp.astype(compute_dtype)
        out = _encoder_call(xp, wp, bp, tm, tn, tk)
        if Mp != B or Hp != hidden:
            out = out[:B, :hidden]
        return out

    return forward


# ----------------------------------------------------------------------------- reference & test

def reference_forward(x, weight, bias):
    y = jax.lax.dot_general(
        x, weight, dimension_numbers=(((1,), (1,)), ((), ())),
        precision=jax.lax.Precision.HIGHEST,
        preferred_element_type=jnp.float32) + bias
    return jnp.maximum(y, 0.0)


def _make_params(key, B, din, hidden):
    kx, kw, kb = jax.random.split(key, 3)
    bound = 1.0 / (din ** 0.5)
    x = jax.random.normal(kx, (B, din), dtype=jnp.float32)
    w = jax.random.uniform(kw, (hidden, din), jnp.float32, -bound, bound)
    b = jax.random.uniform(kb, (hidden,), jnp.float32, -bound, bound)
    return x, w, b


if __name__ == "__main__":
    key = jax.random.PRNGKey(0)
    k1, k2 = jax.random.split(key)

    # 1) Module-consistent toy shape (B=8, din=32, hidden=64) -> padded to 128 lanes.
    x, w, b = _make_params(k1, 8, 32, 64)
    out = encoder_forward(x, w, b)
    jax.block_until_ready(out)
    ref = reference_forward(x, w, b)
    assert out.shape == (8, 64)
    assert jnp.allclose(out, ref, atol=1e-5, rtol=1e-5)

    # 2) Lane-aligned shape where the new tile selection induces ZERO padding
    #    (din=640 -> tk=640, hidden=384 -> tn divides 384, B=128 -> tm=128),
    #    using the pre-laid-out-weight path (no per-call jnp.pad of W).
    x2, w2, b2 = _make_params(k2, 128, 640, 384)
    enc = make_encoder(w2, b2)
    out2 = enc(x2)
    jax.block_until_ready(out2)
    ref2 = reference_forward(x2, w2, b2)
    assert out2.shape == (128, 384)
    assert jnp.allclose(out2, ref2, atol=1e-4, rtol=1e-4)

    # 3) bf16 fast path (f32 accumulation) vs. a bf16-input f32 reference.
    out3 = encoder_forward(x2, w2, b2, compute_dtype=jnp.bfloat16)
    jax.block_until_ready(out3)
    ref3 = reference_forward(x2.astype(jnp.bfloat16).astype(jnp.float32),
                             w2.astype(jnp.bfloat16).astype(jnp.float32), b2)
    assert jnp.allclose(out3, ref3, atol=2e-3, rtol=2e-3)

    print("KERNEL_OK")
</pallas_src>

<mosaic_0001>
module attributes {stable_mosaic.version = 11 : i64} {
  func.func @encoder_kernel(%arg0: i32, %arg1: i32, %arg2: i32, %arg3: memref<8x128xf32, #tpu.memory_space<vmem>>, %arg4: memref<128x128xf32, #tpu.memory_space<vmem>>, %arg5: memref<1x128xf32, #tpu.memory_space<vmem>>, %arg6: memref<8x128xf32, #tpu.memory_space<vmem>>) attributes {dimension_semantics = [#tpu.dimension_semantics<parallel>, #tpu.dimension_semantics<parallel>, #tpu.dimension_semantics<arbitrary>], iteration_bounds = array<i64: 1, 1, 1>, scalar_prefetch = 0 : i64, scratch_operands = 0 : i64, tpu.core_type = #tpu.core_type<tc>, window_params = [{transform_indices = @transform_0, window_bounds = array<i64: 8, 128>}, {transform_indices = @transform_1, window_bounds = array<i64: 128, 128>}, {transform_indices = @transform_2, window_bounds = array<i64: 1, 128>}, {transform_indices = @transform_3, window_bounds = array<i64: 8, 128>}]} {
    %c0 = arith.constant 0 : index
    %c0_0 = arith.constant 0 : index
    %0 = vector.load %arg3[%c0, %c0_0] : memref<8x128xf32, #tpu.memory_space<vmem>>, vector<8x128xf32>
    %c0_1 = arith.constant 0 : index
    %c0_2 = arith.constant 0 : index
    %1 = vector.load %arg4[%c0_1, %c0_2] : memref<128x128xf32, #tpu.memory_space<vmem>>, vector<128x128xf32>
    %cst = arith.constant dense<0.000000e+00> : vector<8x128xf32>
    %2 = tpu.matmul %0, %1, %cst {dimension_numbers = #tpu.dot_dimension_numbers<[1], [1], [0], [0], [0, 0, 1, 0], [], []>} : vector<8x128xf32>, vector<128x128xf32>, vector<8x128xf32> -> vector<8x128xf32>
    %c0_i32 = arith.constant 0 : i32
    %3 = arith.cmpi eq, %arg2, %c0_i32 : i32
    %4 = arith.extui %3 : i1 to i32
    %c0_i32_3 = arith.constant 0 : i32
    %5 = arith.cmpi ne, %4, %c0_i32_3 : i32
    scf.if %5 {
      %c0_8 = arith.constant 0 : index
      %c0_9 = arith.constant 0 : index
      %12 = vector.load %arg6[%c0_8, %c0_9] : memref<8x128xf32, #tpu.memory_space<vmem>>, vector<8x128xf32>
      tpu.vector_store %arg6[%c0_8, %c0_9], %2 {strides = array<i32>} : memref<8x128xf32, #tpu.memory_space<vmem>>, vector<8x128xf32>,
    } else {
    }
    %c0_i32_4 = arith.constant 0 : i32
    %6 = arith.cmpi sgt, %arg2, %c0_i32_4 : i32
    %7 = arith.extui %6 : i1 to i32
    %c0_i32_5 = arith.constant 0 : i32
    %8 = arith.cmpi ne, %7, %c0_i32_5 : i32
    scf.if %8 {
      %c0_8 = arith.constant 0 : index
      %c0_9 = arith.constant 0 : index
      %12 = vector.load %arg6[%c0_8, %c0_9] : memref<8x128xf32, #tpu.memory_space<vmem>>, vector<8x128xf32>
      %13 = arith.addf %12, %2 : vector<8x128xf32>
      %c0_10 = arith.constant 0 : index
      %c0_11 = arith.constant 0 : index
      %14 = vector.load %arg6[%c0_10, %c0_11] : memref<8x128xf32, #tpu.memory_space<vmem>>, vector<8x128xf32>
      tpu.vector_store %arg6[%c0_10, %c0_11], %13 {strides = array<i32>} : memref<8x128xf32, #tpu.memory_space<vmem>>, vector<8x128xf32>,
    } else {
    }
    %c0_i32_6 = arith.constant 0 : i32
    %9 = arith.cmpi eq, %arg2, %c0_i32_6 : i32
    %10 = arith.extui %9 : i1 to i32
    %c0_i32_7 = arith.constant 0 : i32
    %11 = arith.cmpi ne, %10, %c0_i32_7 : i32
    scf.if %11 {
      %c0_8 = arith.constant 0 : index
      %c0_9 = arith.constant 0 : index
      %12 = vector.load %arg6[%c0_8, %c0_9] : memref<8x128xf32, #tpu.memory_space<vmem>>, vector<8x128xf32>
      %c0_10 = arith.constant 0 : index
      %c0_11 = arith.constant 0 : index
      %13 = vector.load %arg5[%c0_10, %c0_11] : memref<1x128xf32, #tpu.memory_space<vmem>>, vector<1x128xf32>
      %14 = vector.broadcast %13 : vector<1x128xf32> to vector<8x128xf32>
      %15 = arith.addf %12, %14 : vector<8x128xf32>
      %cst_12 = arith.constant 0.000000e+00 : f32
      %16 = vector.broadcast %cst_12 : f32 to vector<8x128xf32>
      %17 = arith.maximumf %15, %16 : vector<8x128xf32>
      %c0_13 = arith.constant 0 : index
      %c0_14 = arith.constant 0 : index
      %18 = vector.load %arg6[%c0_13, %c0_14] : memref<8x128xf32, #tpu.memory_space<vmem>>, vector<8x128xf32>
      tpu.vector_store %arg6[%c0_13, %c0_14], %17 {strides = array<i32>} : memref<8x128xf32, #tpu.memory_space<vmem>>, vector<8x128xf32>,
    } else {
    }
    return
  }
  func.func @transform_0(%arg0: i32, %arg1: i32, %arg2: i32) -> (i32, i32) {
    %c0_i32 = arith.constant 0 : i32
    return %arg0, %arg2 : i32, i32
  }
  func.func @transform_1(%arg0: i32, %arg1: i32, %arg2: i32) -> (i32, i32) {
    %c0_i32 = arith.constant 0 : i32
    return %arg1, %arg2 : i32, i32
  }
  func.func @transform_2(%arg0: i32, %arg1: i32, %arg2: i32) -> (i32, i32) {
    %c0_i32 = arith.constant 0 : i32
    %c0_i32_0 = arith.constant 0 : i32
    return %c0_i32, %arg1 : i32, i32
  }
  func.func @transform_3(%arg0: i32, %arg1: i32, %arg2: i32) -> (i32, i32) {
    %c0_i32 = arith.constant 0 : i32
    return %arg0, %arg1 : i32, i32
  }
}

</mosaic_0001>

<llo_original>
// kernel: tpu_custom_call.1
$region0: #{tpu_custom_call.1}
  #allocation0 [shape = 'u32[]', space=smem, size = 0x4, offset = 0x4, fixed_abs, tag = 'smem constant byte address 0x4 - core index']
  #allocation1 [shape = 'u32[144,128]{1,0:T(1,128)}', space=vmem, size = 0x12000, scoped, tag = 'internal scratch']
  %s0 = inlined_call_operand.hbm [shape: f32[8,128], index: 0, kind: input, shape index: {}]
  %s1 = inlined_call_operand.hbm [shape: f32[128,128], index: 1, kind: input, shape index: {}]
  %s2 = inlined_call_operand.vmem [shape: f32[1,128], index: 2, kind: input, shape index: {}]
  %s3 = inlined_call_operand.hbm [shape: f32[8,128], index: 3, kind: output, shape index: {}]
  %s4 = sld [smem:[#allocation0]]
  $region42: #{tpu_custom_call.1} parent=0
    _
  %s6 = ssub.s32 1, %s4
  %s7 = scalar_select 0, %s6, %s4
  $region1: #{tpu_custom_call.1} parent=0
    #allocation2 [shape = 'u8[4096]{0}', space=vmem, size = 0x1000, scoped, tag = 'input window, operand 0, single buffered']
    #allocation3 [shape = 's32[1]{0}', space=sflag, size = 0x4, scoped, tag = 'scoped memory for tpu_custom_call.1']
    #allocation4 [shape = 's32[1]{0}', space=sflag, size = 0x4, scoped, tag = 'scoped memory for tpu_custom_call.1']
    #allocation5 [shape = 'u8[65536]{0}', space=vmem, size = 0x10000, scoped, tag = 'input window, operand 1, single buffered']
    #allocation6 [shape = 's32[1]{0}', space=sflag, size = 0x4, scoped, tag = 'scoped memory for tpu_custom_call.1']
    #allocation7 [shape = 'u8[4096]{0}', space=vmem, size = 0x1000, scoped, tag = 'output window, operand 0, single buffered']
    %8 = vsyncpa [#allocation3], 0
    %9 = vsyncpa [#allocation6], 0
    %10 = vsyncpa [#allocation4], 0
    // Predicated region
    $region2: #{tpu_custom_call.1} parent=1 // pred_check
      _
    $region3: #{tpu_custom_call.1} parent=1 // pred_check_branch
      %12 = sbr.rel (0) target = $region5
    $region4: #{tpu_custom_call.1} parent=1 // pred_region
      %s14 = ssub.s32 128, 128
      %15 = vsyncadd [#allocation3], %s14
      %s17 = sshll.u32 [#allocation2], 4
      %s18 = int_to_ptr.vmem [resolvable:$true] %s17
      %20 = dma.hbm_to_vmem [thread:$0]  %s0, 128, %s18, [#allocation3]
    $region5: #{tpu_custom_call.1} parent=1 // pred_fallthru
      _
    // Predicated region
    $region6: #{tpu_custom_call.1} parent=1 // pred_check
      _
    $region7: #{tpu_custom_call.1} parent=1 // pred_check_branch
      %22 = sbr.rel (0) target = $region9
    $region8: #{tpu_custom_call.1} parent=1 // pred_region
      %s24 = ssub.s32 2048, 2048
      %25 = vsyncadd [#allocation6], %s24
      %s26 = sshll.u32 [#allocation5], 4
      %s27 = int_to_ptr.vmem [resolvable:$true] %s26
      %32 = dma.hbm_to_vmem [thread:$0]  %s1, 2048, %s27, [#allocation6], 128, 128, 8
    $region9: #{tpu_custom_call.1} parent=1 // pred_fallthru
      _
    // Predicated region
    $region10: #{tpu_custom_call.1} parent=1 // pred_check
      _
    $region11: #{tpu_custom_call.1} parent=1 // pred_check_branch
      %34 = sbr.rel (0) target = $region13
    $region12: #{tpu_custom_call.1} parent=1 // pred_region
      _
    $region13: #{tpu_custom_call.1} parent=1 // pred_fallthru
      _
    // Predicated region
    $region14: #{tpu_custom_call.1} parent=1 // pred_check
      _
    $region15: #{tpu_custom_call.1} parent=1 // pred_check_branch
      %36 = sbr.rel (0) target = $region17
    $region16: #{tpu_custom_call.1} parent=1 // pred_region
      %37 = dma.done [#allocation3], 128
    $region17: #{tpu_custom_call.1} parent=1 // pred_fallthru
      _
    // Predicated region
    $region18: #{tpu_custom_call.1} parent=1 // pred_check
      _
    $region19: #{tpu_custom_call.1} parent=1 // pred_check_branch
      %39 = sbr.rel (0) target = $region21
    $region20: #{tpu_custom_call.1} parent=1 // pred_region
      %40 = dma.done [#allocation6], 2048
    $region21: #{tpu_custom_call.1} parent=1 // pred_fallthru
      _
    %v41 = vld [vmem:[#allocation2] sm:$0xff]
    %v42 = vld [vmem:[#allocation5] sm:$0xff]
    %v43 = vld [vmem:[#allocation5 + $0x8] sm:$0xff]
    %v44 = vld [vmem:[#allocation5 + $0x10] sm:$0xff]
    %v45 = vld [vmem:[#allocation5 + $0x18] sm:$0xff]
    %v46 = vld [vmem:[#allocation5 + $0x20] sm:$0xff]
    %v47 = vld [vmem:[#allocation5 + $0x28] sm:$0xff]
    %v48 = vld [vmem:[#allocation5 + $0x30] sm:$0xff]
    %v49 = vld [vmem:[#allocation5 + $0x38] sm:$0xff]
    %v50 = vld [vmem:[#allocation5 + $0x40] sm:$0xff]
    %v51 = vld [vmem:[#allocation5 + $0x48] sm:$0xff]
    %v52 = vld [vmem:[#allocation5 + $0x50] sm:$0xff]
    %v53 = vld [vmem:[#allocation5 + $0x58] sm:$0xff]
    %v54 = vld [vmem:[#allocation5 + $0x60] sm:$0xff]
    %v55 = vld [vmem:[#allocation5 + $0x68] sm:$0xff]
    %v56 = vld [vmem:[#allocation5 + $0x70] sm:$0xff]
    %v57 = vld [vmem:[#allocation5 + $0x78] sm:$0xff]
    %58 = vmatprep.subr.mxu0 0.0
    %59 = vmatpush1.xpose.msra.mxu0 %v42
    %60 = vmatprep.subr.mxu0 0.0
    %61 = vmatpush1.xpose.msra.mxu0 %v43
    %62 = vmatprep.subr.mxu0 0.0
    %63 = vmatpush1.xpose.msra.mxu0 %v44
    %64 = vmatprep.subr.mxu0 0.0
    %65 = vmatpush1.xpose.msra.mxu0 %v45
    %66 = vmatprep.subr.mxu0 0.0
    %67 = vmatpush1.xpose.msra.mxu0 %v46
    %68 = vmatprep.subr.mxu0 0.0
    %69 = vmatpush1.xpose.msra.mxu0 %v47
    %70 = vmatprep.subr.mxu0 0.0
    %71 = vmatpush1.xpose.msra.mxu0 %v48
    %72 = vmatprep.subr.mxu0 0.0
    %73 = vmatpush1.xpose.msra.mxu0 %v49
    %74 = vmatprep.subr.mxu0 0.0
    %75 = vmatpush1.xpose.msra.mxu0 %v50
    %76 = vmatprep.subr.mxu0 0.0
    %77 = vmatpush1.xpose.msra.mxu0 %v51
    %78 = vmatprep.subr.mxu0 0.0
    %79 = vmatpush1.xpose.msra.mxu0 %v52
    %80 = vmatprep.subr.mxu0 0.0
    %81 = vmatpush1.xpose.msra.mxu0 %v53
    %82 = vmatprep.subr.mxu0 0.0
    %83 = vmatpush1.xpose.msra.mxu0 %v54
    %84 = vmatprep.subr.mxu0 0.0
    %85 = vmatpush1.xpose.msra.mxu0 %v55
    %86 = vmatprep.subr.mxu0 0.0
    %87 = vmatpush1.xpose.msra.mxu0 %v56
    %88 = vmatprep.subr.mxu0 0.0
    %89 = vmatpush1.xpose.msra.mxu0 %v57
    %90 = vmatprep.subr.mxu0 0.0
    %91 = vmatpush1.xpose.msra.mxu0 0.0
    %92 = vmatprep.subr.mxu0 0.0
    %93 = vmatpush1.xpose.msra.mxu0 0.0
    %94 = vmatprep.subr.mxu0 0.0
    %95 = vmatpush1.xpose.msra.mxu0 0.0
    %96 = vmatprep.subr.mxu0 0.0
    %97 = vmatpush1.xpose.msra.mxu0 0.0
    %98 = vmatprep.subr.mxu0 0.0
    %99 = vmatpush1.xpose.msra.mxu0 0.0
    %100 = vmatprep.subr.mxu0 0.0
    %101 = vmatpush1.xpose.msra.mxu0 0.0
    %102 = vmatprep.subr.mxu0 0.0
    %103 = vmatpush1.xpose.msra.mxu0 0.0
    %104 = vmatprep.subr.mxu0 0.0
    %105 = vmatpush1.xpose.msra.mxu0 0.0
    %106 = vmatprep.subr.mxu0 0.0
    %107 = vmatpush1.xpose.msra.mxu0 0.0
    %108 = vmatprep.subr.mxu0 0.0
    %109 = vmatpush1.xpose.msra.mxu0 0.0
    %110 = vmatprep.subr.mxu0 0.0
    %111 = vmatpush1.xpose.msra.mxu0 0.0
    %112 = vmatprep.subr.mxu0 0.0
    %113 = vmatpush1.xpose.msra.mxu0 0.0
    %114 = vmatprep.subr.mxu0 0.0
    %115 = vmatpush1.xpose.msra.mxu0 0.0
    %116 = vmatprep.subr.mxu0 0.0
    %117 = vmatpush1.xpose.msra.mxu0 0.0
    %118 = vmatprep.subr.mxu0 0.0
    %119 = vmatpush1.xpose.msra.mxu0 0.0
    %120 = vmatprep.subr.mxu0 0.0
    %121 = vmatpush1.xpose.msra.mxu0 0.0
    %122 = vmatprep.mubr.f32.mxu0 0.0
    %123 = vmatmul.mubr.f32.gmra.mrb[0].mxu0 %v41
    %v124 = vpop.f32.mrb[0].mxu0
    %v125 = vadd.f32 0.0, %v124
    %v126 = vpop.f32.mrb[0].mxu0
    %127 = vdwg.mxu0
    %p128 = scmp.eq.s32.totalorder 0, 0
    // Predicated region
    $region22: #{tpu_custom_call.1} parent=1 // pred_check
      %p129 = pneg %p128
    $region23: #{tpu_custom_call.1} parent=1 // pred_check_branch
      %131 = sbr.rel (%p129) target = $region25
    $region24: #{tpu_custom_call.1} parent=1 // pred_region
      %132 = vst [vmem:[#allocation7] sm:$0xff] %v125
    $region25: #{tpu_custom_call.1} parent=1 // pred_fallthru
      _
    %p133 = scmp.gt.s32.totalorder 0, 0
    // Predicated region
    $region26: #{tpu_custom_call.1} parent=1 // pred_check
      %p134 = pneg %p133
    $region27: #{tpu_custom_call.1} parent=1 // pred_check_branch
      %136 = sbr.rel (%p134) target = $region29
    $region28: #{tpu_custom_call.1} parent=1 // pred_region
      %v137 = vld [vmem:[#allocation7] sm:$0xff]
      %v138 = vadd.f32 %v137, %v125
      %139 = vst [vmem:[#allocation7] sm:$0xff] %v138
    $region29: #{tpu_custom_call.1} parent=1 // pred_fallthru
      _
    // Predicated region
    $region30: #{tpu_custom_call.1} parent=1 // pred_check
      %p140 = pneg %p128
    $region31: #{tpu_custom_call.1} parent=1 // pred_check_branch
      %142 = sbr.rel (%p140) target = $region33
    $region32: #{tpu_custom_call.1} parent=1 // pred_region
      %v143 = vld [vmem:[#allocation7] sm:$0xff]
      %v144 = vld [vmem:[%s2] sm:$0x1]
      %v146 = vlaneseq
      %v147 = vshrl.u32 %v146, 7
      %v148 = vsub.s32 0, %v147
      %v149 = vrot.slane %v144, %v148
      %v151 = vadd.f32 %v143, %v149
      %v152 = vmax.f32 %v151, 0.0
      %153 = vst [vmem:[#allocation7] sm:$0xff] %v152
    $region33: #{tpu_custom_call.1} parent=1 // pred_fallthru
      _
    // Predicated region
    $region34: #{tpu_custom_call.1} parent=1 // pred_check
      _
    $region35: #{tpu_custom_call.1} parent=1 // pred_check_branch
      %155 = sbr.rel (0) target = $region37
    $region36: #{tpu_custom_call.1} parent=1 // pred_region
      %s157 = ssub.s32 128, 128
      %158 = vsyncadd [#allocation4], %s157
      %s160 = sshll.u32 [#allocation7], 4
      %s161 = int_to_ptr.vmem [resolvable:$true] %s160
      %163 = dma.vmem_to_hbm [thread:$0]  %s161, 128, %s3, [#allocation4]
    $region37: #{tpu_custom_call.1} parent=1 // pred_fallthru
      _
    // Predicated region
    $region38: #{tpu_custom_call.1} parent=1 // pred_check
      _
    $region39: #{tpu_custom_call.1} parent=1 // pred_check_branch
      %165 = sbr.rel (0) target = $region41
    $region40: #{tpu_custom_call.1} parent=1 // pred_region
      %166 = dma.done [#allocation4], 128
    $region41: #{tpu_custom_call.1} parent=1 // pred_fallthru
      _
    %167 = vsyncpa [#allocation3], 1
    %168 = vsyncpa [#allocation6], 1
    %169 = vsyncpa [#allocation4], 1

</llo_original>
